<compile_context>
chip_gen: v7x
topology: tpu7x:2x2x1
jax: 0.10.0
libtpu: 0.0.40
codegen_flags: <defaults>
</compile_context>

<pallas_src>
import jax
import jax.numpy as jnp
from jax import lax
from jax.experimental import pallas as pl
from jax.experimental.pallas import tpu as pltpu


# ---------------------------------------------------------------------------
# Kernel
# ---------------------------------------------------------------------------
def _chained_bmm_kernel(x1_ref, x2_ref, v2_ref):
    # x1_ref, x2_ref, v2_ref: (bt, D, D) VMEM tiles for the current batch slab.
    bt = x1_ref.shape[0]

    def body(i, carry):
        a = x1_ref[i]  # (D, D)
        b = x2_ref[i]  # (D, D)
        # v1 = x1 @ x2 ; .detach() has no effect on forward values.
        v1 = jnp.dot(a, b, preferred_element_type=jnp.float32)
        # v2 = bmm(v1, x1); cast v1 back to the input dtype so the MXU runs at
        # input precision (no-op for f32 inputs).
        v2 = jnp.dot(v1.astype(a.dtype), a, preferred_element_type=jnp.float32)
        v2_ref[i] = v2.astype(v2_ref.dtype)
        return carry

    # Fully unroll short trip counts (LLO scheduler visibility); partial unroll
    # otherwise to bound code size while still amortizing loop overhead.
    unroll = bt if bt <= 8 else 4
    lax.fori_loop(0, bt, body, 0, unroll=unroll)


# ---------------------------------------------------------------------------
# Sizing helpers (layout- and generation-aware)
# ---------------------------------------------------------------------------
_SUBLANE_TILE = {4: 8, 2: 16, 1: 32}  # itemsize -> sublane tile


def _padded_matrix_bytes(d, dtype):
    """VMEM footprint of one (d, d) matrix after (sublane, lane) padding."""
    dt = jnp.dtype(dtype)
    sub = _SUBLANE_TILE.get(dt.itemsize, 8)
    rows = -(-d // sub) * sub
    cols = -(-d // 128) * 128
    return rows * cols * dt.itemsize


def _vmem_limit_bytes():
    """Scoped VMEM limit to request: 3/4 of physical, capped at 100 MiB."""
    try:
        phys = int(pltpu.get_tpu_info().vmem_capacity_bytes)
    except Exception:
        phys = 64 << 20  # conservative (v7x-sized part)
    # v7x (64 MiB phys) -> 48 MiB; v5e/v6e (128 MiB phys) -> 96 MiB.
    return int(min(phys * 3 // 4, 100 << 20))


def _pick_batch_tile(B, D, dtype, vmem_limit):
    """Largest batch tile whose double-buffered DMA tiles fit the VMEM budget,
    capped so that B > 1 always yields >= 2 grid steps (megacore + pipelining)."""
    tile_bytes = _padded_matrix_bytes(D, dtype)
    # Double-buffered DMA tiles per batch element: 2 bufs x (2 inputs + 1 output).
    per_elem = 2 * 3 * tile_bytes
    # Fixed overhead: one f32 v1 + one f32 v2 live at a time (per-element loop)
    # plus slack for compiler-internal scratch.
    fixed = 2 * _padded_matrix_bytes(D, jnp.float32) + (2 << 20)
    budget = max(vmem_limit - fixed, per_elem)
    bt = int(max(1, min(B, budget // per_elem)))
    if B > 1:
        bt = min(bt, pl.cdiv(B, 2))  # >= 2 grid steps: shards across v7x TCs
    return bt


# ---------------------------------------------------------------------------
# Wrapper
# ---------------------------------------------------------------------------
def chained_bmm(x1, x2):
    """Computes v2 = (x1 @ x2) @ x1 for batched square matrices (B, D, D)."""
    B, D, D2 = x1.shape
    assert D == D2 and x2.shape == (B, D, D), "expected matching (B, D, D) inputs"

    vmem_limit = _vmem_limit_bytes()
    bt = _pick_batch_tile(B, D, x1.dtype, vmem_limit)
    n_steps = pl.cdiv(B, bt)  # ragged last block handled by Pallas (no jnp.pad)

    itemsize = jnp.dtype(x1.dtype).itemsize
    cost = pl.CostEstimate(
        flops=4 * B * D * D * D,                 # two D^3 matmuls per element
        transcendentals=0,
        bytes_accessed=3 * B * D * D * itemsize,  # 2 inputs + 1 output
    )

    return pl.pallas_call(
        _chained_bmm_kernel,
        out_shape=jax.ShapeDtypeStruct((B, D, D), x1.dtype),
        grid=(n_steps,),
        in_specs=[
            pl.BlockSpec((bt, D, D), lambda i: (i, 0, 0)),
            pl.BlockSpec((bt, D, D), lambda i: (i, 0, 0)),
        ],
        out_specs=pl.BlockSpec((bt, D, D), lambda i: (i, 0, 0)),
        compiler_params=pltpu.CompilerParams(
            # Batch slabs are independent: shards across v7x's two TensorCores,
            # harmless (sequential loop) on single-TC v5e/v6e.
            dimension_semantics=("parallel",),
            vmem_limit_bytes=vmem_limit,
        ),
        cost_estimate=cost,
    )(x1, x2)


class Model:
    """Mirrors the torch Model.forward semantics (returns None)."""

    def forward(self, x1, x2):
        # NOTE: the torch forward discards v2 and returns None; we still run
        # the fused kernel to mirror the computation faithfully.
        v1 = chained_bmm(x1, x2)
        del v1
        return None


if __name__ == "__main__":
    key = jax.random.PRNGKey(0)
    k1, k2 = jax.random.split(key)

    # Small shapes consistent with the module's (batch, D, D) batched matmuls.
    B, D = 2, 16
    x1 = jax.random.normal(k1, (B, D, D), dtype=jnp.float32)
    x2 = jax.random.normal(k2, (B, D, D), dtype=jnp.float32)

    v2 = chained_bmm(x1, x2)
    jax.block_until_ready(v2)

    ref = jnp.einsum("bij,bjk->bik", jnp.einsum("bij,bjk->bik", x1, x2), x1)
    assert jnp.allclose(v2, ref, atol=1e-4, rtol=1e-4)

    # Exercise the ragged (non-divisible) batch path — no host-side padding.
    B2 = 5
    y1 = jax.random.normal(k1, (B2, D, D), dtype=jnp.float32)
    y2 = jax.random.normal(k2, (B2, D, D), dtype=jnp.float32)
    w2 = chained_bmm(y1, y2)
    jax.block_until_ready(w2)
    ref2 = jnp.einsum("bij,bjk->bik", jnp.einsum("bij,bjk->bik", y1, y2), y1)
    assert jnp.allclose(w2, ref2, atol=1e-4, rtol=1e-4)

    # The module's forward itself returns None.
    m = Model()
    assert m.forward(x1, x2) is None

    print("KERNEL_OK")
</pallas_src>

<mosaic_0001>
module attributes {stable_mosaic.version = 11 : i64} {
  func.func @_chained_bmm_kernel(%arg0: i32, %arg1: memref<1x16x16xf32, #tpu.memory_space<vmem>>, %arg2: memref<1x16x16xf32, #tpu.memory_space<vmem>>, %arg3: memref<1x16x16xf32, #tpu.memory_space<vmem>>) attributes {dimension_semantics = [#tpu.dimension_semantics<parallel>], iteration_bounds = array<i64: 2>, scalar_prefetch = 0 : i64, scratch_operands = 0 : i64, tpu.core_type = #tpu.core_type<tc>, window_params = [{transform_indices = @transform_0, window_bounds = array<i64: 1, 16, 16>}, {transform_indices = @transform_1, window_bounds = array<i64: 1, 16, 16>}, {transform_indices = @transform_2, window_bounds = array<i64: 1, 16, 16>}]} {
    %c0_i32 = arith.constant 0 : i32
    %0 = arith.index_cast %c0_i32 : i32 to index
    %c0 = arith.constant 0 : index
    %c0_0 = arith.constant 0 : index
    %1 = vector.load %arg1[%0, %c0, %c0_0] : memref<1x16x16xf32, #tpu.memory_space<vmem>>, vector<1x16x16xf32>
    %2 = vector.shape_cast %1 : vector<1x16x16xf32> to vector<16x16xf32>
    %3 = arith.index_cast %c0_i32 : i32 to index
    %c0_1 = arith.constant 0 : index
    %c0_2 = arith.constant 0 : index
    %4 = vector.load %arg2[%3, %c0_1, %c0_2] : memref<1x16x16xf32, #tpu.memory_space<vmem>>, vector<1x16x16xf32>
    %5 = vector.shape_cast %4 : vector<1x16x16xf32> to vector<16x16xf32>
    %cst = arith.constant dense<0.000000e+00> : vector<16x16xf32>
    %6 = tpu.matmul %2, %5, %cst {dimension_numbers = #tpu.dot_dimension_numbers<[1], [0], [0], [1], [0, 0, 1, 1], [], []>} : vector<16x16xf32>, vector<16x16xf32>, vector<16x16xf32> -> vector<16x16xf32>
    %cst_3 = arith.constant dense<0.000000e+00> : vector<16x16xf32>
    %7 = tpu.matmul %6, %2, %cst_3 {dimension_numbers = #tpu.dot_dimension_numbers<[1], [0], [0], [1], [0, 0, 1, 1], [], []>} : vector<16x16xf32>, vector<16x16xf32>, vector<16x16xf32> -> vector<16x16xf32>
    %8 = arith.index_cast %c0_i32 : i32 to index
    %c0_4 = arith.constant 0 : index
    %c0_5 = arith.constant 0 : index
    %9 = vector.load %arg3[%8, %c0_4, %c0_5] : memref<1x16x16xf32, #tpu.memory_space<vmem>>, vector<1x16x16xf32>
    %10 = vector.shape_cast %9 : vector<1x16x16xf32> to vector<16x16xf32>
    %11 = vector.shape_cast %7 : vector<16x16xf32> to vector<1x16x16xf32>
    tpu.vector_store %arg3[%8, %c0_4, %c0_5], %11 {strides = array<i32>} : memref<1x16x16xf32, #tpu.memory_space<vmem>>, vector<1x16x16xf32>,
    %c1_i32 = arith.constant 1 : i32
    return
  }
  func.func @transform_0(%arg0: i32) -> (i32, i32, i32) {
    %c0_i32 = arith.constant 0 : i32
    %c0_i32_0 = arith.constant 0 : i32
    %c0_i32_1 = arith.constant 0 : i32
    return %arg0, %c0_i32, %c0_i32_0 : i32, i32, i32
  }
  func.func @transform_1(%arg0: i32) -> (i32, i32, i32) {
    %c0_i32 = arith.constant 0 : i32
    %c0_i32_0 = arith.constant 0 : i32
    %c0_i32_1 = arith.constant 0 : i32
    return %arg0, %c0_i32, %c0_i32_0 : i32, i32, i32
  }
  func.func @transform_2(%arg0: i32) -> (i32, i32, i32) {
    %c0_i32 = arith.constant 0 : i32
    %c0_i32_0 = arith.constant 0 : i32
    %c0_i32_1 = arith.constant 0 : i32
    return %arg0, %c0_i32, %c0_i32_0 : i32, i32, i32
  }
}

</mosaic_0001>

<llo_original>
// kernel: tpu_custom_call.1
$region0: #{tpu_custom_call.1}
  #allocation0 [shape = 'u32[]', space=smem, size = 0x4, offset = 0x4, fixed_abs, tag = 'smem constant byte address 0x4 - core index']
  #allocation1 [shape = 'u32[144,128]{1,0:T(1,128)}', space=vmem, size = 0x12000, scoped, tag = 'internal scratch']
  %s0 = inlined_call_operand.hbm [shape: f32[2,16,16], index: 0, kind: input, shape index: {}]
  %s1 = inlined_call_operand.hbm [shape: f32[2,16,16], index: 1, kind: input, shape index: {}]
  %s2 = inlined_call_operand.hbm [shape: f32[2,16,16], index: 2, kind: output, shape index: {}]
  %s3 = sld [smem:[#allocation0]]
  $region49: #{tpu_custom_call.1} parent=0
    _
  %s5 = ssub.s32 1, %s3
  %s6 = scalar_select 0, %s5, %s3
  $region1: #{tpu_custom_call.1} parent=0
    #allocation2 [shape = 'u8[16384]{0}', space=vmem, size = 0x4000, scoped, tag = 'input window, operand 0']
    #allocation3 [shape = 's32[2]{0}', space=sflag, size = 0x8, scoped, tag = 'scoped memory for tpu_custom_call.1']
    #allocation4 [shape = 's32[2]{0}', space=sflag, size = 0x8, scoped, tag = 'scoped memory for tpu_custom_call.1']
    #allocation5 [shape = 'u8[16384]{0}', space=vmem, size = 0x4000, scoped, tag = 'input window, operand 1']
    #allocation6 [shape = 's32[2]{0}', space=sflag, size = 0x8, scoped, tag = 'scoped memory for tpu_custom_call.1']
    #allocation7 [shape = 'u8[16384]{0}', space=vmem, size = 0x4000, scoped, tag = 'output window, operand 0']
    %7 = vsyncpa [#allocation3], 0
    %s8 = scalar_lea.sflag [#allocation3], 1
    %9 = vsyncpa %s8, 0
    %10 = vsyncpa [#allocation6], 0
    %s11 = scalar_lea.sflag [#allocation6], 1
    %12 = vsyncpa %s11, 0
    %13 = vsyncpa [#allocation4], 0
    %s14 = scalar_lea.sflag [#allocation4], 1
    %15 = vsyncpa %s14, 0
    loop: start=0, step=1, limit=4
    $region2: #{tpu_custom_call.1} parent=1 // loop_pre_header
      _
    $region3: #{tpu_custom_call.1} parent=1 // loop_header
      %s17 = sphi 0, %s21
      %p18 = scmp.ge.s32.totalorder %s17, 4
      %s27 = sphi 0, %s29
      %s30 = sphi 0, %s27
      %s31 = sphi 0, %s30
      %s47 = sphi 0, %s31
      %s53 = sphi 0, %s55
      %s56 = sphi 0, %s53
      %s57 = sphi 0, %s56
      %s73 = sphi 0, %s57
      %s79 = sphi 0, %s81
      %s82 = sphi 0, %s79
      %s83 = sphi 0, %s82
      %s99 = sphi 0, %s83
    $region4: #{tpu_custom_call.1} parent=1 // loop_header_branch
      %20 = sbr.rel (%p18) target = $region8
    $region5: #{tpu_custom_call.1} parent=1 // loop_body
      %s22 = ssub.s32 %s17, 1
      %s23 = ssub.s32 %s17, 2
      %s24 = sadd.s32 %s17, 1
      %s25 = ssub.s32 %s17, %s24
      %p26 = scmp.eq.s32.totalorder %s25, 0
      %s28 = sadd.s32 %s27, 1
      %s29 = scalar_select %p26, %s27, %s28
      %p32 = pneg %p26
      %p33 = scmp.eq.s32.totalorder %s17, 1
      %p34 = por %p32, %p33
      %p35 = scmp.ne.s32.totalorder %s27, %s30
      %p36 = scmp.eq.s32.totalorder %s17, 0
      %p37 = por %p35, %p36
      %p38 = scmp.ne.s32.totalorder %s27, %s30
      %p39 = scmp.eq.s32.totalorder %s22, 1
      %p40 = por %p38, %p39
      %p41 = scmp.ne.s32.totalorder %s30, %s31
      %p42 = scmp.eq.s32.totalorder %s22, 0
      %p43 = por %p41, %p42
      %p44 = scmp.ne.s32.totalorder %s30, %s31
      %p45 = scmp.eq.s32.totalorder %s23, 1
      %p46 = por %p44, %p45
      %p48 = scmp.ne.s32.totalorder %s31, %s47
      %p49 = scmp.eq.s32.totalorder %s23, 0
      %p50 = por %p48, %p49
      %s51 = ssub.s32 %s17, %s24
      %p52 = scmp.eq.s32.totalorder %s51, 0
      %s54 = sadd.s32 %s53, 1
      %s55 = scalar_select %p52, %s53, %s54
      %p58 = pneg %p52
      %p59 = scmp.eq.s32.totalorder %s17, 1
      %p60 = por %p58, %p59
      %p61 = scmp.ne.s32.totalorder %s53, %s56
      %p62 = scmp.eq.s32.totalorder %s17, 0
      %p63 = por %p61, %p62
      %p64 = scmp.ne.s32.totalorder %s53, %s56
      %p65 = scmp.eq.s32.totalorder %s22, 1
      %p66 = por %p64, %p65
      %p67 = scmp.ne.s32.totalorder %s56, %s57
      %p68 = scmp.eq.s32.totalorder %s22, 0
      %p69 = por %p67, %p68
      %p70 = scmp.ne.s32.totalorder %s56, %s57
      %p71 = scmp.eq.s32.totalorder %s23, 1
      %p72 = por %p70, %p71
      %p74 = scmp.ne.s32.totalorder %s57, %s73
      %p75 = scmp.eq.s32.totalorder %s23, 0
      %p76 = por %p74, %p75
      %s77 = ssub.s32 %s17, %s24
      %p78 = scmp.eq.s32.totalorder %s77, 0
      %s80 = sadd.s32 %s79, 1
      %s81 = scalar_select %p78, %s79, %s80
      %p84 = pneg %p78
      %p85 = scmp.eq.s32.totalorder %s17, 1
      %p86 = por %p84, %p85
      %p87 = scmp.ne.s32.totalorder %s79, %s82
      %p88 = scmp.eq.s32.totalorder %s17, 0
      %p89 = por %p87, %p88
      %p90 = scmp.ne.s32.totalorder %s79, %s82
      %p91 = scmp.eq.s32.totalorder %s22, 1
      %p92 = por %p90, %p91
      %p93 = scmp.ne.s32.totalorder %s82, %s83
      %p94 = scmp.eq.s32.totalorder %s22, 0
      %p95 = por %p93, %p94
      %p96 = scmp.ne.s32.totalorder %s82, %s83
      %p97 = scmp.eq.s32.totalorder %s23, 1
      %p98 = por %p96, %p97
      %p100 = scmp.ne.s32.totalorder %s83, %s99
      %p101 = scmp.eq.s32.totalorder %s23, 0
      %p102 = por %p100, %p101
      %p103 = scmp.le.s32.totalorder 1, %s17
      %p104 = scmp.lt.s32.totalorder %s17, 3
      %p105 = pnand %p103, %p104
      %p106 = pneg %p105
      // Predicated region
      $region9: #{tpu_custom_call.1} parent=5 // pred_check
        _
      $region10: #{tpu_custom_call.1} parent=5 // pred_check_branch
        %108 = sbr.rel (%p105) target = $region12
      $region11: #{tpu_custom_call.1} parent=5 // pred_region
        %s109 = ssub.s32 %s17, 1
      $region12: #{tpu_custom_call.1} parent=5 // pred_fallthru
        _
      %p110 = scmp.lt.s32.totalorder %s17, 2
      // Predicated region
      $region13: #{tpu_custom_call.1} parent=5 // pred_check
        %p111 = pneg %p110
      $region14: #{tpu_custom_call.1} parent=5 // pred_check_branch
        %113 = sbr.rel (%p111) target = $region16
      $region15: #{tpu_custom_call.1} parent=5 // pred_region
        // Predicated region
        $region17: #{tpu_custom_call.1} parent=15 // pred_check
          %p114 = pneg %p37
        $region18: #{tpu_custom_call.1} parent=15 // pred_check_branch
          %116 = sbr.rel (%p114) target = $region20
        $region19: #{tpu_custom_call.1} parent=15 // pred_region
          %s117 = sand.u32 %s27, 1
          %s118 = scalar_lea.sflag [#allocation3], %s117
          %s119 = sand.u32 %s27, 1
          %s120 = smul.addr %s119, 16
          %s121 = scalar_lea.vmem [#allocation2], %s120
          %s123 = ssub.s32 256, 256
          %124 = vsyncadd %s118, %s123
          %s125 = smul.addr %s17, 2
          %s126 = smul.addr %s125, 128
          %s127 = scalar_lea.hbm %s0, %s126
          %s128 = sshll.u32 %s121, 4
          %s129 = int_to_ptr.vmem [resolvable:$true] %s128
          %134 = dma.hbm_to_vmem [thread:$0]  %s127, 256, %s129, %s118, 128, 128, 8
        $region20: #{tpu_custom_call.1} parent=15 // pred_fallthru
          _
        // Predicated region
        $region21: #{tpu_custom_call.1} parent=15 // pred_check
          %p135 = pneg %p63
        $region22: #{tpu_custom_call.1} parent=15 // pred_check_branch
          %137 = sbr.rel (%p135) target = $region24
        $region23: #{tpu_custom_call.1} parent=15 // pred_region
          %s138 = sand.u32 %s53, 1
          %s139 = scalar_lea.sflag [#allocation6], %s138
          %s140 = sand.u32 %s53, 1
          %s141 = smul.addr %s140, 16
          %s142 = scalar_lea.vmem [#allocation5], %s141
          %s144 = ssub.s32 256, 256
          %145 = vsyncadd %s139, %s144
          %s146 = smul.addr %s17, 2
          %s147 = smul.addr %s146, 128
          %s148 = scalar_lea.hbm %s1, %s147
          %s149 = sshll.u32 %s142, 4
          %s150 = int_to_ptr.vmem [resolvable:$true] %s149
          %155 = dma.hbm_to_vmem [thread:$0]  %s148, 256, %s150, %s139, 128, 128, 8
        $region24: #{tpu_custom_call.1} parent=15 // pred_fallthru
          _
      $region16: #{tpu_custom_call.1} parent=5 // pred_fallthru
        _
      %p156 = scmp.le.s32.totalorder 1, %s17
      %p157 = scmp.lt.s32.totalorder %s17, 3
      %p158 = pnand %p156, %p157
      %p159 = pneg %p158
      // Predicated region
      $region25: #{tpu_custom_call.1} parent=5 // pred_check
        _
      $region26: #{tpu_custom_call.1} parent=5 // pred_check_branch
        %161 = sbr.rel (%p158) target = $region28
      $region27: #{tpu_custom_call.1} parent=5 // pred_region
        %s162 = ssub.s32 %s17, 1
        %s163 = sand.u32 %s30, 1
        %s164 = scalar_lea.sflag [#allocation3], %s163
        %s165 = sand.u32 %s30, 1
        %s166 = smul.addr %s165, 16
        %s167 = scalar_lea.vmem [#allocation2], %s166
        // Predicated region
        $region29: #{tpu_custom_call.1} parent=27 // pred_check
          %p168 = pneg %p43
        $region30: #{tpu_custom_call.1} parent=27 // pred_check_branch
          %170 = sbr.rel (%p168) target = $region32
        $region31: #{tpu_custom_call.1} parent=27 // pred_region
          %171 = dma.done %s164, 256
        $region32: #{tpu_custom_call.1} parent=27 // pred_fallthru
          _
        %s172 = sand.u32 %s56, 1
        %s173 = scalar_lea.sflag [#allocation6], %s172
        %s174 = sand.u32 %s56, 1
        %s175 = smul.addr %s174, 16
        %s176 = scalar_lea.vmem [#allocation5], %s175
        // Predicated region
        $region33: #{tpu_custom_call.1} parent=27 // pred_check
          %p177 = pneg %p69
        $region34: #{tpu_custom_call.1} parent=27 // pred_check_branch
          %179 = sbr.rel (%p177) target = $region36
        $region35: #{tpu_custom_call.1} parent=27 // pred_region
          %180 = dma.done %s173, 256
        $region36: #{tpu_custom_call.1} parent=27 // pred_fallthru
          _
        %s181 = sand.u32 %s30, 1
        %s182 = scalar_lea.sflag [#allocation3], %s181
        %s183 = sand.u32 %s30, 1
        %s184 = smul.addr %s183, 16
        %s185 = scalar_lea.vmem [#allocation2], %s184
        %p186 = pneg %p43
        %p187 = pneg %p40
        %s188 = sand.u32 %s56, 1
        %s189 = scalar_lea.sflag [#allocation6], %s188
        %s190 = sand.u32 %s56, 1
        %s191 = smul.addr %s190, 16
        %s192 = scalar_lea.vmem [#allocation5], %s191
        %p193 = pneg %p69
        %p194 = pneg %p66
        %p195 = pneg %p95
        %p196 = pneg %p92
        %s197 = sand.u32 %s82, 1
        %s198 = scalar_lea.sflag [#allocation4], %s197
        %s199 = sand.u32 %s82, 1
        %s200 = smul.addr %s199, 16
        %s201 = scalar_lea.vmem [#allocation7], %s200
        %v202 = vld [vmem:[%s167] sm:$0xff]
        %v203 = vld [vmem:[%s167 + $0x8] sm:$0xff]
        %v204 = vld [vmem:[%s176] sm:$0xff]
        %v205 = vld [vmem:[%s176 + $0x8] sm:$0xff]
        %vm206 = vcmask 130048
        %v208 = vsel %vm206, %v202, 0
        %v211 = vsel %vm206, %v203, 0
        %213 = vmatprep.subr.mxu0 0.0
        %214 = vmatpush1.msra.mxu0 %v204
        %215 = vmatprep.subr.mxu0 0.0
        %216 = vmatpush1.msra.mxu0 %v205
        %217 = vmatprep.subr.mxu0 0.0
        %218 = vmatpush1.msra.mxu0 0.0
        %219 = vmatprep.subr.mxu0 0.0
        %220 = vmatpush1.msra.mxu0 0.0
        %221 = vmatprep.subr.mxu0 0.0
        %222 = vmatpush1.msra.mxu0 0.0
        %223 = vmatprep.subr.mxu0 0.0
        %224 = vmatpush1.msra.mxu0 0.0
        %225 = vmatprep.subr.mxu0 0.0
        %226 = vmatpush1.msra.mxu0 0.0
        %227 = vmatprep.subr.mxu0 0.0
        %228 = vmatpush1.msra.mxu0 0.0
        %229 = vmatprep.subr.mxu0 0.0
        %230 = vmatpush1.msra.mxu0 0.0
        %231 = vmatprep.subr.mxu0 0.0
        %232 = vmatpush1.msra.mxu0 0.0
        %233 = vmatprep.subr.mxu0 0.0
        %234 = vmatpush1.msra.mxu0 0.0
        %235 = vmatprep.subr.mxu0 0.0
        %236 = vmatpush1.msra.mxu0 0.0
        %237 = vmatprep.subr.mxu0 0.0
        %238 = vmatpush1.msra.mxu0 0.0
        %239 = vmatprep.subr.mxu0 0.0
        %240 = vmatpush1.msra.mxu0 0.0
        %241 = vmatprep.subr.mxu0 0.0
        %242 = vmatpush1.msra.mxu0 0.0
        %243 = vmatprep.subr.mxu0 0.0
        %244 = vmatpush1.msra.mxu0 0.0
        %245 = vmatprep.subr.mxu0 0.0
        %246 = vmatpush1.msra.mxu0 0.0
        %247 = vmatprep.subr.mxu0 0.0
        %248 = vmatpush1.msra.mxu0 0.0
        %249 = vmatprep.subr.mxu0 0.0
        %250 = vmatpush1.msra.mxu0 0.0
        %251 = vmatprep.subr.mxu0 0.0
        %252 = vmatpush1.msra.mxu0 0.0
        %253 = vmatprep.subr.mxu0 0.0
        %254 = vmatpush1.msra.mxu0 0.0
        %255 = vmatprep.subr.mxu0 0.0
        %256 = vmatpush1.msra.mxu0 0.0
        %257 = vmatprep.subr.mxu0 0.0
        %258 = vmatpush1.msra.mxu0 0.0
        %259 = vmatprep.subr.mxu0 0.0
        %260 = vmatpush1.msra.mxu0 0.0
        %261 = vmatprep.subr.mxu0 0.0
        %262 = vmatpush1.msra.mxu0 0.0
        %263 = vmatprep.subr.mxu0 0.0
        %264 = vmatpush1.msra.mxu0 0.0
        %265 = vmatprep.subr.mxu0 0.0
        %266 = vmatpush1.msra.mxu0 0.0
        %267 = vmatprep.subr.mxu0 0.0
        %268 = vmatpush1.msra.mxu0 0.0
        %269 = vmatprep.subr.mxu0 0.0
        %270 = vmatpush1.msra.mxu0 0.0
        %271 = vmatprep.subr.mxu0 0.0
        %272 = vmatpush1.msra.mxu0 0.0
        %273 = vmatprep.subr.mxu0 0.0
        %274 = vmatpush1.msra.mxu0 0.0
        %275 = vmatprep.subr.mxu0 0.0
        %276 = vmatpush1.msra.mxu0 0.0
        %277 = vmatprep.mubr.f32.mxu0 0.0
        %278 = vmatmul.mubr.f32.gmra.mrb[0].mxu0 %v208
        %v279 = vpop.f32.mrb[0].mxu0
        %v280 = vadd.f32 0.0, %v279
        %v281 = vpop.f32.mrb[0].mxu0
        %282 = vmatprep.mubr.f32.mxu0 0.0
        %283 = vmatmul.mubr.f32.gmra.mrb[0].mxu0 %v211
        %v284 = vpop.f32.mrb[0].mxu0
        %v285 = vadd.f32 0.0, %v284
        %v286 = vpop.f32.mrb[0].mxu0
        %287 = vdwg.mxu0
        %v289 = vsel %vm206, %v280, 0
        %v292 = vsel %vm206, %v285, 0
        %294 = vmatprep.subr.mxu0 0.0
        %295 = vmatpush1.msra.mxu0 %v202
        %296 = vmatprep.subr.mxu0 0.0
        %297 = vmatpush1.msra.mxu0 %v203
        %298 = vmatprep.subr.mxu0 0.0
        %299 = vmatpush1.msra.mxu0 0.0
        %300 = vmatprep.subr.mxu0 0.0
        %301 = vmatpush1.msra.mxu0 0.0
        %302 = vmatprep.subr.mxu0 0.0
        %303 = vmatpush1.msra.mxu0 0.0
        %304 = vmatprep.subr.mxu0 0.0
        %305 = vmatpush1.msra.mxu0 0.0
        %306 = vmatprep.subr.mxu0 0.0
        %307 = vmatpush1.msra.mxu0 0.0
        %308 = vmatprep.subr.mxu0 0.0
        %309 = vmatpush1.msra.mxu0 0.0
        %310 = vmatprep.subr.mxu0 0.0
        %311 = vmatpush1.msra.mxu0 0.0
        %312 = vmatprep.subr.mxu0 0.0
        %313 = vmatpush1.msra.mxu0 0.0
        %314 = vmatprep.subr.mxu0 0.0
        %315 = vmatpush1.msra.mxu0 0.0
        %316 = vmatprep.subr.mxu0 0.0
        %317 = vmatpush1.msra.mxu0 0.0
        %318 = vmatprep.subr.mxu0 0.0
        %319 = vmatpush1.msra.mxu0 0.0
        %320 = vmatprep.subr.mxu0 0.0
        %321 = vmatpush1.msra.mxu0 0.0
        %322 = vmatprep.subr.mxu0 0.0
        %323 = vmatpush1.msra.mxu0 0.0
        %324 = vmatprep.subr.mxu0 0.0
        %325 = vmatpush1.msra.mxu0 0.0
        %326 = vmatprep.subr.mxu0 0.0
        %327 = vmatpush1.msra.mxu0 0.0
        %328 = vmatprep.subr.mxu0 0.0
        %329 = vmatpush1.msra.mxu0 0.0
        %330 = vmatprep.subr.mxu0 0.0
        %331 = vmatpush1.msra.mxu0 0.0
        %332 = vmatprep.subr.mxu0 0.0
        %333 = vmatpush1.msra.mxu0 0.0
        %334 = vmatprep.subr.mxu0 0.0
        %335 = vmatpush1.msra.mxu0 0.0
        %336 = vmatprep.subr.mxu0 0.0
        %337 = vmatpush1.msra.mxu0 0.0
        %338 = vmatprep.subr.mxu0 0.0
        %339 = vmatpush1.msra.mxu0 0.0
        %340 = vmatprep.subr.mxu0 0.0
        %341 = vmatpush1.msra.mxu0 0.0
        %342 = vmatprep.subr.mxu0 0.0
        %343 = vmatpush1.msra.mxu0 0.0
        %344 = vmatprep.subr.mxu0 0.0
        %345 = vmatpush1.msra.mxu0 0.0
        %346 = vmatprep.subr.mxu0 0.0
        %347 = vmatpush1.msra.mxu0 0.0
        %348 = vmatprep.subr.mxu0 0.0
        %349 = vmatpush1.msra.mxu0 0.0
        %350 = vmatprep.subr.mxu0 0.0
        %351 = vmatpush1.msra.mxu0 0.0
        %352 = vmatprep.subr.mxu0 0.0
        %353 = vmatpush1.msra.mxu0 0.0
        %354 = vmatprep.subr.mxu0 0.0
        %355 = vmatpush1.msra.mxu0 0.0
        %356 = vmatprep.subr.mxu0 0.0
        %357 = vmatpush1.msra.mxu0 0.0
        %358 = vmatprep.mubr.f32.mxu0 0.0
        %359 = vmatmul.mubr.f32.gmra.mrb[0].mxu0 %v289
        %v360 = vpop.f32.mrb[0].mxu0
        %v361 = vadd.f32 0.0, %v360
        %v362 = vpop.f32.mrb[0].mxu0
        %363 = vmatprep.mubr.f32.mxu0 0.0
        %364 = vmatmul.mubr.f32.gmra.mrb[0].mxu0 %v292
        %v365 = vpop.f32.mrb[0].mxu0
        %v366 = vadd.f32 0.0, %v365
        %v367 = vpop.f32.mrb[0].mxu0
        %368 = vdwg.mxu0
        %369 = vst.msk [vmem:[%s201] sm:$0xff] %vm206, %v361
        %370 = vst.msk [vmem:[%s201 + $0x8] sm:$0xff] %vm206, %v366
        %s371 = sand.u32 %s82, 1
        %s372 = scalar_lea.sflag [#allocation4], %s371
        %s373 = sand.u32 %s82, 1
        %s374 = smul.addr %s373, 16
        %s375 = scalar_lea.vmem [#allocation7], %s374
        // Predicated region
        $region37: #{tpu_custom_call.1} parent=27 // pred_check
          %p376 = pneg %p92
        $region38: #{tpu_custom_call.1} parent=27 // pred_check_branch
          %378 = sbr.rel (%p376) target = $region40
        $region39: #{tpu_custom_call.1} parent=27 // pred_region
          %s380 = ssub.s32 256, 256
          %381 = vsyncadd %s372, %s380
          %s382 = smul.addr %s22, 2
          %s383 = smul.addr %s382, 128
          %s384 = scalar_lea.hbm %s2, %s383
          %s385 = sshll.u32 %s375, 4
          %s386 = int_to_ptr.vmem [resolvable:$true] %s385
          %391 = dma.vmem_to_hbm [thread:$0]  %s386, 256, %s384, %s372, 128, 128, 8
        $region40: #{tpu_custom_call.1} parent=27 // pred_fallthru
          _
      $region28: #{tpu_custom_call.1} parent=5 // pred_fallthru
        _
      %p392 = scmp.le.s32.totalorder 2, %s17
      // Predicated region
      $region41: #{tpu_custom_call.1} parent=5 // pred_check
        %p393 = pneg %p392
      $region42: #{tpu_custom_call.1} parent=5 // pred_check_branch
        %395 = sbr.rel (%p393) target = $region44
      $region43: #{tpu_custom_call.1} parent=5 // pred_region
        %s396 = ssub.s32 %s17, 2
        // Predicated region
        $region45: #{tpu_custom_call.1} parent=43 // pred_check
          %p397 = pneg %p98
        $region46: #{tpu_custom_call.1} parent=43 // pred_check_branch
          %399 = sbr.rel (%p397) target = $region48
        $region47: #{tpu_custom_call.1} parent=43 // pred_region
          %s400 = sand.u32 %s83, 1
          %s401 = scalar_lea.sflag [#allocation4], %s400
          %s402 = sand.u32 %s83, 1
          %s403 = smul.addr %s402, 16
          %s404 = scalar_lea.vmem [#allocation7], %s403
          %405 = dma.done %s401, 256
        $region48: #{tpu_custom_call.1} parent=43 // pred_fallthru
          _
      $region44: #{tpu_custom_call.1} parent=5 // pred_fallthru
        _
    $region6: #{tpu_custom_call.1} parent=1 // loop_footer
      %s21 = sadd.s32 1, %s17
    $region7: #{tpu_custom_call.1} parent=1 // loop_footer_branch
      %16 = sbr.rel target = $region3
    $region8: #{tpu_custom_call.1} parent=1 // loop_exit
      _
    %406 = vsyncpa [#allocation3], 1
    %s407 = scalar_lea.sflag [#allocation3], 1
    %408 = vsyncpa %s407, 1
    %409 = vsyncpa [#allocation6], 1
    %s410 = scalar_lea.sflag [#allocation6], 1
    %411 = vsyncpa %s410, 1
    %412 = vsyncpa [#allocation4], 1
    %s413 = scalar_lea.sflag [#allocation4], 1
    %414 = vsyncpa %s413, 1

</llo_original>
